<compile_context>
chip_gen: v6e
topology: v6e:2x2x1
jax: 0.10.0
libtpu: 0.0.40
codegen_flags: <defaults>
</compile_context>

<pallas_src>
import functools

import jax
import jax.numpy as jnp
from jax import lax
from jax.experimental import pallas as pl
from jax.experimental.pallas import tpu as pltpu

F_IN = 2     # input features
F_HID = 30   # hidden features
F_OUT = 2    # output classes
F_PAD = 32   # hidden padded to 32; row 30 carries the bias-folding "1", row 31 is zero


def _round_up(n, m):
    return ((n + m - 1) // m) * m


# ----------------------------------------------------------------------------- kernel
def net4_kernel(xT_ref, w1_ref, b1_ref, w2_ref, w3_ref, oT_ref, *, chunk, n_chunks):
    # Tiny weights: load once per grid step (loop-invariant, lives in vregs).
    w1 = w1_ref[...]          # (32, 2)   fc1 weight, rows 30/31 zero
    b1 = b1_ref[...]          # (32, 1)   fc1 bias,  row 30 == 1 (bias-folding pivot)
    w2 = w2_ref[...]          # (32, 32)  [fc2 | b2] augmented, row 30 = e_30
    w3 = w3_ref[...]          # (2, 32)   [fc3 | b3] augmented
    w1c0 = w1[:, 0:1]
    w1c1 = w1[:, 1:2]

    def body(c, carry):
        off = pl.multiple_of(c * chunk, chunk)
        x0 = xT_ref[0:1, pl.ds(off, chunk)]                       # (1, chunk)
        x1 = xT_ref[1:2, pl.ds(off, chunk)]                       # (1, chunk)

        # fc1 (K=2) + ReLU on the VPU: two broadcast FMAs. Row 30 of h1 == 1.
        h1 = jnp.maximum(w1c0 * x0 + w1c1 * x1 + b1, 0.0)         # (32, chunk)

        # fc2 + ReLU on the MXU; b2 folded into column 30 of w2 (h1[30] == 1).
        h2 = jnp.maximum(
            jnp.dot(w2, h1, preferred_element_type=jnp.float32), 0.0)  # (32, chunk)

        # fc3 on the MXU; b3 folded into column 30 of w3 (h2[30] == 1).
        logits = jnp.dot(w3, h2, preferred_element_type=jnp.float32)    # (2, chunk)

        # 2-class log_softmax over the feature axis: one EUP exp over the slab,
        # no cross-lane reductions (feature axis is the 2-row sublane axis).
        m = jnp.maximum(logits[0:1, :], logits[1:2, :])            # (1, chunk)
        p = jnp.exp(logits - m)                                    # (2, chunk)
        lse = m + jnp.log(p[0:1, :] + p[1:2, :])                   # (1, chunk)

        oT_ref[:, pl.ds(off, chunk)] = logits - lse                # lane-dense store
        return carry

    lax.fori_loop(0, n_chunks, body, 0, unroll=(n_chunks <= 8))


# ----------------------------------------------------------------------------- wrapper
def pack_params(params):
    """Pack PyTorch-layout params into MXU-friendly augmented matrices.

    Bias folding: h1 gets a constant-1 row (row 30) via b1p; w2p row 30 = e_30
    propagates that 1 through fc2, and columns 30 of w2p / w3p carry b2 / b3.
    """
    w1, b1, w2, b2, w3, b3 = [jnp.asarray(p, jnp.float32) for p in params]
    b1 = b1.reshape(-1)
    b2 = b2.reshape(-1)
    b3 = b3.reshape(-1)

    w1p = jnp.zeros((F_PAD, F_IN), jnp.float32).at[:F_HID, :].set(w1)
    b1p = (jnp.zeros((F_PAD, 1), jnp.float32)
           .at[:F_HID, 0].set(b1)
           .at[F_HID, 0].set(1.0))
    w2p = (jnp.zeros((F_PAD, F_PAD), jnp.float32)
           .at[:F_HID, :F_HID].set(w2)
           .at[:F_HID, F_HID].set(b2)
           .at[F_HID, F_HID].set(1.0))
    w3p = (jnp.zeros((F_OUT, F_PAD), jnp.float32)
           .at[:, :F_HID].set(w3)
           .at[:, F_HID].set(b3))
    return w1p, b1p, w2p, w3p


def _choose_tiling(batch, *, chunk, tb_max, split_min):
    """Pick (tile, padded_batch). Large batches get >= 2 grid steps (v7x megacore)."""
    total = _round_up(max(batch, 1), chunk)
    if total >= split_min:
        half = _round_up((total + 1) // 2, chunk)
        tb = min(tb_max, half)
    else:
        tb = min(total, tb_max)
    b_pad = _round_up(total, tb)
    return tb, b_pad


def net4_forward(x, packed_params, *, x_transposed=False, return_transposed=False,
                 chunk=512, tb_max=32768, split_min=16384):
    """Forward pass.

    x: (B, 2) float32 (or (2, B) if x_transposed=True).
    Returns (B, 2) log-probabilities (or (2, B) if return_transposed=True).
    """
    w1p, b1p, w2p, w3p = packed_params
    batch = x.shape[1] if x_transposed else x.shape[0]

    tb, b_pad = _choose_tiling(batch, chunk=chunk, tb_max=tb_max, split_min=split_min)
    nb = b_pad // tb
    chunk_eff = min(chunk, tb)
    n_chunks = tb // chunk_eff

    if x_transposed:
        xT = jnp.pad(x.astype(jnp.float32), ((0, 0), (0, b_pad - batch)))
    else:
        # Single pad+transpose pass (fused by XLA under jit).
        xT = jnp.pad(x.astype(jnp.float32), ((0, b_pad - batch), (0, 0))).T

    kernel = functools.partial(net4_kernel, chunk=chunk_eff, n_chunks=n_chunks)

    weight_bytes = 4 * (F_PAD * F_IN + F_PAD + F_PAD * F_PAD + F_OUT * F_PAD)
    cost = pl.CostEstimate(
        flops=2 * b_pad * (F_IN * F_PAD + F_PAD * F_PAD + F_PAD * F_OUT),
        transcendentals=3 * b_pad,
        bytes_accessed=4 * (F_IN + F_OUT) * b_pad + weight_bytes,
    )

    out_T = pl.pallas_call(
        kernel,
        out_shape=jax.ShapeDtypeStruct((F_OUT, b_pad), jnp.float32),
        grid_spec=pltpu.PrefetchScalarGridSpec(
            num_scalar_prefetch=0,
            grid=(nb,),
            in_specs=[
                pl.BlockSpec((F_IN, tb), lambda i: (0, i)),       # xT: streamed per tile
                pl.BlockSpec((F_PAD, F_IN), lambda i: (0, 0)),    # w1p: resident
                pl.BlockSpec((F_PAD, 1), lambda i: (0, 0)),       # b1p
                pl.BlockSpec((F_PAD, F_PAD), lambda i: (0, 0)),   # w2p (bias folded)
                pl.BlockSpec((F_OUT, F_PAD), lambda i: (0, 0)),   # w3p (bias folded)
            ],
            out_specs=pl.BlockSpec((F_OUT, tb), lambda i: (0, i)),
        ),
        compiler_params=pltpu.CompilerParams(
            dimension_semantics=("parallel",),                    # batch tiles across TCs (v7x)
        ),
        cost_estimate=cost,
    )(xT, w1p, b1p, w2p, w3p)

    if return_transposed:
        return out_T[:, :batch]
    return out_T[:, :batch].T


# ----------------------------------------------------------------------------- reference & init
def init_params(key):
    """PyTorch nn.Linear default init (uniform +-1/sqrt(fan_in)), PyTorch layout."""
    ks = jax.random.split(key, 6)

    def linear(kw, kb, fan_in, fan_out):
        bound = fan_in ** -0.5
        w = jax.random.uniform(kw, (fan_out, fan_in), jnp.float32, -bound, bound)
        b = jax.random.uniform(kb, (fan_out,), jnp.float32, -bound, bound)
        return w, b

    w1, b1 = linear(ks[0], ks[1], 2, 30)
    w2, b2 = linear(ks[2], ks[3], 30, 30)
    w3, b3 = linear(ks[4], ks[5], 30, 2)
    return (w1, b1, w2, b2, w3, b3)


def net4_reference(x, params):
    """Pure-JAX reference mirroring the PyTorch forward exactly."""
    w1, b1, w2, b2, w3, b3 = params
    h1 = jnp.maximum(x @ w1.T + b1, 0.0)
    h2 = jnp.maximum(h1 @ w2.T + b2, 0.0)
    logits = h2 @ w3.T + b3
    return jax.nn.log_softmax(logits, axis=-1)


# ----------------------------------------------------------------------------- main
if __name__ == "__main__":
    key = jax.random.PRNGKey(0)
    kx, kx2, kp = jax.random.split(key, 3)

    params = init_params(kp)
    packed = pack_params(params)

    fwd = jax.jit(lambda xx, pp: net4_forward(xx, pp))

    # Small deterministic test (B=8): single tile, single chunk.
    B = 8
    x = jax.random.normal(kx, (B, 2), dtype=jnp.float32)
    out = jax.block_until_ready(fwd(x, packed))
    ref = net4_reference(x, params)
    assert out.shape == (B, 2)
    assert jnp.allclose(out, ref, atol=1e-5, rtol=1e-5)

    # Second check exercising the in-kernel chunk loop and batch padding
    # (B not a multiple of the 512-lane chunk).
    B2 = 1030
    x2 = jax.random.normal(kx2, (B2, 2), dtype=jnp.float32)
    out2 = jax.block_until_ready(fwd(x2, packed))
    ref2 = net4_reference(x2, params)
    assert out2.shape == (B2, 2)
    assert jnp.allclose(out2, ref2, atol=1e-5, rtol=1e-5)

    print("KERNEL_OK")
</pallas_src>

<mosaic_0001>
module attributes {stable_mosaic.version = 11 : i64} {
  func.func @net4_kernel(%arg0: i32, %arg1: memref<2x512xf32, #tpu.memory_space<vmem>>, %arg2: memref<32x2xf32, #tpu.memory_space<vmem>>, %arg3: memref<32x1xf32, #tpu.memory_space<vmem>>, %arg4: memref<32x32xf32, #tpu.memory_space<vmem>>, %arg5: memref<2x32xf32, #tpu.memory_space<vmem>>, %arg6: memref<2x512xf32, #tpu.memory_space<vmem>>) attributes {dimension_semantics = [#tpu.dimension_semantics<parallel>], iteration_bounds = array<i64: 1>, scalar_prefetch = 0 : i64, scratch_operands = 0 : i64, tpu.core_type = #tpu.core_type<tc>, window_params = [{transform_indices = @transform_0, window_bounds = array<i64: 2, 512>}, {pipeline_mode = #tpu.pipeline_mode<synchronous>, transform_indices = @transform_1, window_bounds = array<i64: 32, 2>}, {pipeline_mode = #tpu.pipeline_mode<synchronous>, transform_indices = @transform_2, window_bounds = array<i64: 32, 1>}, {pipeline_mode = #tpu.pipeline_mode<synchronous>, transform_indices = @transform_3, window_bounds = array<i64: 32, 32>}, {pipeline_mode = #tpu.pipeline_mode<synchronous>, transform_indices = @transform_4, window_bounds = array<i64: 2, 32>}, {transform_indices = @transform_5, window_bounds = array<i64: 2, 512>}]} {
    %c0 = arith.constant 0 : index
    %c0_0 = arith.constant 0 : index
    %0 = vector.load %arg2[%c0, %c0_0] : memref<32x2xf32, #tpu.memory_space<vmem>>, vector<32x2xf32>
    %c0_1 = arith.constant 0 : index
    %c0_2 = arith.constant 0 : index
    %1 = vector.load %arg3[%c0_1, %c0_2] : memref<32x1xf32, #tpu.memory_space<vmem>>, vector<32x1xf32>
    %c0_3 = arith.constant 0 : index
    %c0_4 = arith.constant 0 : index
    %2 = vector.load %arg4[%c0_3, %c0_4] : memref<32x32xf32, #tpu.memory_space<vmem>>, vector<32x32xf32>
    %c0_5 = arith.constant 0 : index
    %c0_6 = arith.constant 0 : index
    %3 = vector.load %arg5[%c0_5, %c0_6] : memref<2x32xf32, #tpu.memory_space<vmem>>, vector<2x32xf32>
    %4 = vector.extract_strided_slice %0 {offsets = [0, 0], sizes = [32, 1], strides = [1, 1]} : vector<32x2xf32> to vector<32x1xf32>
    %5 = vector.extract_strided_slice %0 {offsets = [0, 1], sizes = [32, 1], strides = [1, 1]} : vector<32x2xf32> to vector<32x1xf32>
    %c0_i32 = arith.constant 0 : i32
    %c512_i32 = arith.constant 512 : i32
    %6 = arith.muli %c0_i32, %c512_i32 : i32
    %7 = tpu.assume_multiple %6, 512 : i32
    %c0_7 = arith.constant 0 : index
    %8 = arith.index_cast %7 : i32 to index
    %9 = vector.load %arg1[%c0_7, %8] : memref<2x512xf32, #tpu.memory_space<vmem>>, vector<1x512xf32>
    %c1 = arith.constant 1 : index
    %10 = arith.index_cast %7 : i32 to index
    %11 = vector.load %arg1[%c1, %10] : memref<2x512xf32, #tpu.memory_space<vmem>>, vector<1x512xf32>
    %12 = vector.broadcast %4 : vector<32x1xf32> to vector<32x512xf32>
    %13 = vector.broadcast %9 : vector<1x512xf32> to vector<32x512xf32>
    %14 = arith.mulf %12, %13 : vector<32x512xf32>
    %15 = vector.broadcast %5 : vector<32x1xf32> to vector<32x512xf32>
    %16 = vector.broadcast %11 : vector<1x512xf32> to vector<32x512xf32>
    %17 = arith.mulf %15, %16 : vector<32x512xf32>
    %18 = arith.addf %14, %17 : vector<32x512xf32>
    %19 = vector.broadcast %1 : vector<32x1xf32> to vector<32x512xf32>
    %20 = arith.addf %18, %19 : vector<32x512xf32>
    %cst = arith.constant 0.000000e+00 : f32
    %21 = vector.broadcast %cst : f32 to vector<32x512xf32>
    %22 = arith.maximumf %20, %21 : vector<32x512xf32>
    %cst_8 = arith.constant dense<0.000000e+00> : vector<32x512xf32>
    %23 = tpu.matmul %2, %22, %cst_8 {dimension_numbers = #tpu.dot_dimension_numbers<[1], [0], [0], [1], [0, 0, 1, 1], [], []>} : vector<32x32xf32>, vector<32x512xf32>, vector<32x512xf32> -> vector<32x512xf32>
    %cst_9 = arith.constant 0.000000e+00 : f32
    %24 = vector.broadcast %cst_9 : f32 to vector<32x512xf32>
    %25 = arith.maximumf %23, %24 : vector<32x512xf32>
    %cst_10 = arith.constant dense<0.000000e+00> : vector<2x512xf32>
    %26 = tpu.matmul %3, %25, %cst_10 {dimension_numbers = #tpu.dot_dimension_numbers<[1], [0], [0], [1], [0, 0, 1, 1], [], []>} : vector<2x32xf32>, vector<32x512xf32>, vector<2x512xf32> -> vector<2x512xf32>
    %27 = vector.extract_strided_slice %26 {offsets = [0, 0], sizes = [1, 512], strides = [1, 1]} : vector<2x512xf32> to vector<1x512xf32>
    %28 = vector.extract_strided_slice %26 {offsets = [1, 0], sizes = [1, 512], strides = [1, 1]} : vector<2x512xf32> to vector<1x512xf32>
    %29 = arith.maximumf %27, %28 : vector<1x512xf32>
    %30 = vector.broadcast %29 : vector<1x512xf32> to vector<2x512xf32>
    %31 = arith.subf %26, %30 : vector<2x512xf32>
    %32 = math.exp %31 : vector<2x512xf32>
    %33 = vector.extract_strided_slice %32 {offsets = [0, 0], sizes = [1, 512], strides = [1, 1]} : vector<2x512xf32> to vector<1x512xf32>
    %34 = vector.extract_strided_slice %32 {offsets = [1, 0], sizes = [1, 512], strides = [1, 1]} : vector<2x512xf32> to vector<1x512xf32>
    %35 = arith.addf %33, %34 : vector<1x512xf32>
    %36 = math.log %35 : vector<1x512xf32>
    %37 = arith.addf %29, %36 : vector<1x512xf32>
    %38 = vector.broadcast %37 : vector<1x512xf32> to vector<2x512xf32>
    %39 = arith.subf %26, %38 : vector<2x512xf32>
    %c0_11 = arith.constant 0 : index
    %40 = arith.index_cast %7 : i32 to index
    %41 = vector.load %arg6[%c0_11, %40] : memref<2x512xf32, #tpu.memory_space<vmem>>, vector<2x512xf32>
    tpu.vector_store %arg6[%c0_11, %40], %39 {strides = array<i32>} : memref<2x512xf32, #tpu.memory_space<vmem>>, vector<2x512xf32>,
    %c1_i32 = arith.constant 1 : i32
    return
  }
  func.func @transform_0(%arg0: i32) -> (i32, i32) {
    %c0_i32 = arith.constant 0 : i32
    %c0_i32_0 = arith.constant 0 : i32
    return %c0_i32, %arg0 : i32, i32
  }
  func.func @transform_1(%arg0: i32) -> (i32, i32) {
    %c0_i32 = arith.constant 0 : i32
    %c0_i32_0 = arith.constant 0 : i32
    %c0_i32_1 = arith.constant 0 : i32
    return %c0_i32, %c0_i32_0 : i32, i32
  }
  func.func @transform_2(%arg0: i32) -> (i32, i32) {
    %c0_i32 = arith.constant 0 : i32
    %c0_i32_0 = arith.constant 0 : i32
    %c0_i32_1 = arith.constant 0 : i32
    return %c0_i32, %c0_i32_0 : i32, i32
  }
  func.func @transform_3(%arg0: i32) -> (i32, i32) {
    %c0_i32 = arith.constant 0 : i32
    %c0_i32_0 = arith.constant 0 : i32
    %c0_i32_1 = arith.constant 0 : i32
    return %c0_i32, %c0_i32_0 : i32, i32
  }
  func.func @transform_4(%arg0: i32) -> (i32, i32) {
    %c0_i32 = arith.constant 0 : i32
    %c0_i32_0 = arith.constant 0 : i32
    %c0_i32_1 = arith.constant 0 : i32
    return %c0_i32, %c0_i32_0 : i32, i32
  }
  func.func @transform_5(%arg0: i32) -> (i32, i32) {
    %c0_i32 = arith.constant 0 : i32
    %c0_i32_0 = arith.constant 0 : i32
    return %c0_i32, %arg0 : i32, i32
  }
}

</mosaic_0001>

<llo_original>
// kernel: _lambda_.1
$region0: #{_lambda_.1}
  #allocation0 [shape = 'u32[]', space=smem, size = 0x4, offset = 0x4, fixed_abs, tag = 'smem constant byte address 0x4 - core index']
  #allocation1 [shape = 'u32[144,128]{1,0:T(1,128)}', space=vmem, size = 0x12000, scoped, tag = 'internal scratch']
  %s0 = inlined_call_operand.vmem [shape: f32[2,512], index: 0, kind: input, shape index: {}]
  %s1 = inlined_call_operand.vmem [shape: f32[32,2], index: 1, kind: input, shape index: {}]
  %s2 = inlined_call_operand.vmem [shape: f32[32,1], index: 2, kind: input, shape index: {}]
  %s3 = inlined_call_operand.vmem [shape: f32[32,32], index: 3, kind: input, shape index: {}]
  %s4 = inlined_call_operand.vmem [shape: f32[2,32], index: 4, kind: input, shape index: {}]
  %s5 = inlined_call_operand.vmem [shape: f32[2,512], index: 5, kind: output, shape index: {}]
  %s6 = sld [smem:[#allocation0]]
  $region30: #{_lambda_.1} parent=0
    _
  %s8 = ssub.s32 1, %s6
  %s9 = scalar_select 0, %s8, %s6
  // Predicated region
  $region2: #{_lambda_.1} parent=0 // pred_check
    _
  $region3: #{_lambda_.1} parent=0 // pred_check_branch
    %11 = sbr.rel (0) target = $region5
  $region4: #{_lambda_.1} parent=0 // pred_region
    _
  $region5: #{_lambda_.1} parent=0 // pred_fallthru
    _
  // Predicated region
  $region6: #{_lambda_.1} parent=0 // pred_check
    _
  $region7: #{_lambda_.1} parent=0 // pred_check_branch
    %13 = sbr.rel (0) target = $region9
  $region8: #{_lambda_.1} parent=0 // pred_region
    _
  $region9: #{_lambda_.1} parent=0 // pred_fallthru
    _
  // Predicated region
  $region10: #{_lambda_.1} parent=0 // pred_check
    _
  $region11: #{_lambda_.1} parent=0 // pred_check_branch
    %15 = sbr.rel (0) target = $region13
  $region12: #{_lambda_.1} parent=0 // pred_region
    _
  $region13: #{_lambda_.1} parent=0 // pred_fallthru
    _
  // Predicated region
  $region14: #{_lambda_.1} parent=0 // pred_check
    _
  $region15: #{_lambda_.1} parent=0 // pred_check_branch
    %17 = sbr.rel (0) target = $region17
  $region16: #{_lambda_.1} parent=0 // pred_region
    _
  $region17: #{_lambda_.1} parent=0 // pred_fallthru
    _
  // Predicated region
  $region18: #{_lambda_.1} parent=0 // pred_check
    _
  $region19: #{_lambda_.1} parent=0 // pred_check_branch
    %19 = sbr.rel (0) target = $region21
  $region20: #{_lambda_.1} parent=0 // pred_region
    _
  $region21: #{_lambda_.1} parent=0 // pred_fallthru
    _
  %v20 = vld [vmem:[%s1] sm:$0xff]
  %v21 = vld [vmem:[%s1 + $0x8] sm:$0xff]
  %v22 = vld [vmem:[%s1 + $0x10] sm:$0xff]
  %v23 = vld [vmem:[%s1 + $0x18] sm:$0xff]
  %v24 = vld [vmem:[%s2] sm:$0xff]
  %v25 = vld [vmem:[%s2 + $0x8] sm:$0xff]
  %v26 = vld [vmem:[%s2 + $0x10] sm:$0xff]
  %v27 = vld [vmem:[%s2 + $0x18] sm:$0xff]
  %v28 = vld [vmem:[%s3] sm:$0xff]
  %v29 = vld [vmem:[%s3 + $0x8] sm:$0xff]
  %v30 = vld [vmem:[%s3 + $0x10] sm:$0xff]
  %v31 = vld [vmem:[%s3 + $0x18] sm:$0xff]
  %v32 = vld [vmem:[%s4] sm:$0x3]
  %v33 = vld [vmem:[%s0] ss:$2 sm:$0xf]
  %s34 = scalar_lea.vmem %s0, 1
  %v35 = vld [vmem:[%s34] ss:$2 sm:$0xf]
  %37 = vset.pattern.permute.xlu0 0
  %38 = vperm.xlu0 %37, %v20
  %v39 = vpop.permute.xlu0 %38
  %42 = vset.pattern.permute.xlu0 0
  %43 = vperm.xlu0 %42, %v21
  %v44 = vpop.permute.xlu0 %43
  %47 = vset.pattern.permute.xlu0 0
  %48 = vperm.xlu0 %47, %v22
  %v49 = vpop.permute.xlu0 %48
  %52 = vset.pattern.permute.xlu0 0
  %53 = vperm.xlu0 %52, %v23
  %v54 = vpop.permute.xlu0 %53
  %v57 = vlaneseq
  %v58 = vshrl.u32 %v57, 7
  %v59 = vsub.s32 0, %v58
  %v60 = vrot.slane %v33, %v59
  %v61 = vlaneseq
  %v62 = vshrl.u32 %v61, 7
  %v63 = vsub.s32 1, %v62
  %v64 = vrot.slane %v33, %v63
  %v65 = vlaneseq
  %v66 = vshrl.u32 %v65, 7
  %v67 = vsub.s32 2, %v66
  %v68 = vrot.slane %v33, %v67
  %v69 = vlaneseq
  %v70 = vshrl.u32 %v69, 7
  %v71 = vsub.s32 3, %v70
  %v72 = vrot.slane %v33, %v71
  %v77 = vmul.f32 %v39, %v60
  %v78 = vmul.f32 %v39, %v64
  %v79 = vmul.f32 %v39, %v68
  %v80 = vmul.f32 %v39, %v72
  %v81 = vmul.f32 %v44, %v60
  %v82 = vmul.f32 %v44, %v64
  %v83 = vmul.f32 %v44, %v68
  %v84 = vmul.f32 %v44, %v72
  %v85 = vmul.f32 %v49, %v60
  %v86 = vmul.f32 %v49, %v64
  %v87 = vmul.f32 %v49, %v68
  %v88 = vmul.f32 %v49, %v72
  %v89 = vmul.f32 %v54, %v60
  %v90 = vmul.f32 %v54, %v64
  %v91 = vmul.f32 %v54, %v68
  %v92 = vmul.f32 %v54, %v72
  %93 = vset.pattern.permute.xlu0 1
  %94 = vperm.xlu0 %93, %v20
  %v95 = vpop.permute.xlu0 %94
  %97 = vset.pattern.permute.xlu0 1
  %98 = vperm.xlu0 %97, %v21
  %v99 = vpop.permute.xlu0 %98
  %101 = vset.pattern.permute.xlu0 1
  %102 = vperm.xlu0 %101, %v22
  %v103 = vpop.permute.xlu0 %102
  %105 = vset.pattern.permute.xlu0 1
  %106 = vperm.xlu0 %105, %v23
  %v107 = vpop.permute.xlu0 %106
  %v110 = vlaneseq
  %v111 = vshrl.u32 %v110, 7
  %v112 = vsub.s32 0, %v111
  %v113 = vrot.slane %v35, %v112
  %v114 = vlaneseq
  %v115 = vshrl.u32 %v114, 7
  %v116 = vsub.s32 1, %v115
  %v117 = vrot.slane %v35, %v116
  %v118 = vlaneseq
  %v119 = vshrl.u32 %v118, 7
  %v120 = vsub.s32 2, %v119
  %v121 = vrot.slane %v35, %v120
  %v122 = vlaneseq
  %v123 = vshrl.u32 %v122, 7
  %v124 = vsub.s32 3, %v123
  %v125 = vrot.slane %v35, %v124
  %v130 = vmul.f32 %v95, %v113
  %v131 = vmul.f32 %v95, %v117
  %v132 = vmul.f32 %v95, %v121
  %v133 = vmul.f32 %v95, %v125
  %v134 = vmul.f32 %v99, %v113
  %v135 = vmul.f32 %v99, %v117
  %v136 = vmul.f32 %v99, %v121
  %v137 = vmul.f32 %v99, %v125
  %v138 = vmul.f32 %v103, %v113
  %v139 = vmul.f32 %v103, %v117
  %v140 = vmul.f32 %v103, %v121
  %v141 = vmul.f32 %v103, %v125
  %v142 = vmul.f32 %v107, %v113
  %v143 = vmul.f32 %v107, %v117
  %v144 = vmul.f32 %v107, %v121
  %v145 = vmul.f32 %v107, %v125
  %v146 = vadd.f32 %v77, %v130
  %v147 = vadd.f32 %v78, %v131
  %v148 = vadd.f32 %v79, %v132
  %v149 = vadd.f32 %v80, %v133
  %v150 = vadd.f32 %v81, %v134
  %v151 = vadd.f32 %v82, %v135
  %v152 = vadd.f32 %v83, %v136
  %v153 = vadd.f32 %v84, %v137
  %v154 = vadd.f32 %v85, %v138
  %v155 = vadd.f32 %v86, %v139
  %v156 = vadd.f32 %v87, %v140
  %v157 = vadd.f32 %v88, %v141
  %v158 = vadd.f32 %v89, %v142
  %v159 = vadd.f32 %v90, %v143
  %v160 = vadd.f32 %v91, %v144
  %v161 = vadd.f32 %v92, %v145
  %163 = vset.pattern.permute.xlu0 0
  %164 = vperm.xlu0 %163, %v24
  %v165 = vpop.permute.xlu0 %164
  %168 = vset.pattern.permute.xlu0 0
  %169 = vperm.xlu0 %168, %v25
  %v170 = vpop.permute.xlu0 %169
  %173 = vset.pattern.permute.xlu0 0
  %174 = vperm.xlu0 %173, %v26
  %v175 = vpop.permute.xlu0 %174
  %178 = vset.pattern.permute.xlu0 0
  %179 = vperm.xlu0 %178, %v27
  %v180 = vpop.permute.xlu0 %179
  %v182 = vadd.f32 %v146, %v165
  %v183 = vadd.f32 %v147, %v165
  %v184 = vadd.f32 %v148, %v165
  %v185 = vadd.f32 %v149, %v165
  %v186 = vadd.f32 %v150, %v170
  %v187 = vadd.f32 %v151, %v170
  %v188 = vadd.f32 %v152, %v170
  %v189 = vadd.f32 %v153, %v170
  %v190 = vadd.f32 %v154, %v175
  %v191 = vadd.f32 %v155, %v175
  %v192 = vadd.f32 %v156, %v175
  %v193 = vadd.f32 %v157, %v175
  %v194 = vadd.f32 %v158, %v180
  %v195 = vadd.f32 %v159, %v180
  %v196 = vadd.f32 %v160, %v180
  %v197 = vadd.f32 %v161, %v180
  %v198 = vmax.f32 %v182, 0.0
  %v199 = vmax.f32 %v183, 0.0
  %v200 = vmax.f32 %v184, 0.0
  %v201 = vmax.f32 %v185, 0.0
  %v202 = vmax.f32 %v186, 0.0
  %v203 = vmax.f32 %v187, 0.0
  %v204 = vmax.f32 %v188, 0.0
  %v205 = vmax.f32 %v189, 0.0
  %v206 = vmax.f32 %v190, 0.0
  %v207 = vmax.f32 %v191, 0.0
  %v208 = vmax.f32 %v192, 0.0
  %v209 = vmax.f32 %v193, 0.0
  %v210 = vmax.f32 %v194, 0.0
  %v211 = vmax.f32 %v195, 0.0
  %v212 = vmax.f32 %v196, 0.0
  %v213 = vmax.f32 %v197, 0.0
  %vm214 = vcmask 261120
  %v216 = vsel %vm214, %v28, 0
  %v219 = vsel %vm214, %v29, 0
  %v222 = vsel %vm214, %v30, 0
  %v225 = vsel %vm214, %v31, 0
  %227 = vmatprep.subr.mxu0 0.0
  %228 = vmatpush1.msra.mxu0 0.0
  %229 = vmatprep.subr.mxu0 0.0
  %230 = vmatpush1.msra.mxu0 0.0
  %231 = vmatprep.subr.mxu0 0.0
  %232 = vmatpush1.msra.mxu0 0.0
  %233 = vmatprep.subr.mxu0 0.0
  %234 = vmatpush1.msra.mxu0 0.0
  %235 = vmatprep.subr.mxu0 0.0
  %236 = vmatpush1.msra.mxu0 0.0
  %237 = vmatprep.subr.mxu0 0.0
  %238 = vmatpush1.msra.mxu0 0.0
  %239 = vmatprep.subr.mxu0 0.0
  %240 = vmatpush1.msra.mxu0 0.0
  %241 = vmatprep.subr.mxu0 0.0
  %242 = vmatpush1.msra.mxu0 0.0
  %243 = vmatprep.subr.mxu0 0.0
  %244 = vmatpush1.msra.mxu0 0.0
  %245 = vmatprep.subr.mxu0 0.0
  %246 = vmatpush1.msra.mxu0 0.0
  %247 = vmatprep.subr.mxu0 0.0
  %248 = vmatpush1.msra.mxu0 0.0
  %249 = vmatprep.subr.mxu0 0.0
  %250 = vmatpush1.msra.mxu0 0.0
  %251 = vmatprep.subr.mxu0 %v211
  %252 = vmatpush1.msra.mxu0 %v210
  %253 = vmatprep.subr.mxu0 %v207
  %254 = vmatpush1.msra.mxu0 %v206
  %255 = vmatprep.subr.mxu0 %v203
  %256 = vmatpush1.msra.mxu0 %v202
  %257 = vmatprep.subr.mxu0 %v199
  %258 = vmatpush1.msra.mxu0 %v198
  %259 = vmatprep.subr.mxu0 0.0
  %260 = vmatpush2.msra.mxu0 0.0
  %261 = vmatprep.subr.mxu0 0.0
  %262 = vmatpush2.msra.mxu0 0.0
  %263 = vmatprep.subr.mxu0 0.0
  %264 = vmatpush2.msra.mxu0 0.0
  %265 = vmatprep.subr.mxu0 0.0
  %266 = vmatpush2.msra.mxu0 0.0
  %267 = vmatprep.subr.mxu0 0.0
  %268 = vmatpush2.msra.mxu0 0.0
  %269 = vmatprep.subr.mxu0 0.0
  %270 = vmatpush2.msra.mxu0 0.0
  %271 = vmatprep.subr.mxu0 0.0
  %272 = vmatpush2.msra.mxu0 0.0
  %273 = vmatprep.subr.mxu0 0.0
  %274 = vmatpush2.msra.mxu0 0.0
  %275 = vmatprep.subr.mxu0 0.0
  %276 = vmatpush2.msra.mxu0 0.0
  %277 = vmatprep.subr.mxu0 0.0
  %278 = vmatpush2.msra.mxu0 0.0
  %279 = vmatprep.subr.mxu0 0.0
  %280 = vmatpush2.msra.mxu0 0.0
  %281 = vmatprep.subr.mxu0 0.0
  %282 = vmatpush2.msra.mxu0 0.0
  %283 = vmatprep.subr.mxu0 0.0
  %284 = vmatpush2.msra.mxu0 0.0
  %285 = vmatprep.subr.mxu0 0.0
  %286 = vmatpush2.msra.mxu0 0.0
  %287 = vmatprep.subr.mxu0 0.0
  %288 = vmatpush2.msra.mxu0 0.0
  %289 = vmatprep.subr.mxu0 0.0
  %290 = vmatpush2.msra.mxu0 0.0
  %291 = vmatprep.mubr.f32.mxu0 0.0
  %292 = vmatmul.mubr.f32.gmra.mxu0 %v216
  %v293 = vpop.f32.mrf.mxu0
  %v294 = vadd.f32 0.0, %v293
  %v295 = vpop.f32.mrf.mxu0
  %v296 = vadd.f32 0.0, %v295
  %297 = vmatprep.mubr.f32.mxu0 0.0
  %298 = vmatmul.mubr.f32.gmra.mxu0 %v219
  %v299 = vpop.f32.mrf.mxu0
  %v300 = vadd.f32 0.0, %v299
  %v301 = vpop.f32.mrf.mxu0
  %v302 = vadd.f32 0.0, %v301
  %303 = vmatprep.mubr.f32.mxu0 0.0
  %304 = vmatmul.mubr.f32.gmra.mxu0 %v222
  %v305 = vpop.f32.mrf.mxu0
  %v306 = vadd.f32 0.0, %v305
  %v307 = vpop.f32.mrf.mxu0
  %v308 = vadd.f32 0.0, %v307
  %309 = vmatprep.mubr.f32.mxu0 0.0
  %310 = vmatmul.mubr.f32.gmra.mxu0 %v225
  %v311 = vpop.f32.mrf.mxu0
  %v312 = vadd.f32 0.0, %v311
  %v313 = vpop.f32.mrf.mxu0
  %v314 = vadd.f32 0.0, %v313
  %315 = vdwg.mxu0
  %316 = vmatprep.subr.mxu0 0.0
  %317 = vmatpush1.msra.mxu0 0.0
  %318 = vmatprep.subr.mxu0 0.0
  %319 = vmatpush1.msra.mxu0 0.0
  %320 = vmatprep.subr.mxu0 0.0
  %321 = vmatpush1.msra.mxu0 0.0
  %322 = vmatprep.subr.mxu0 0.0
  %323 = vmatpush1.msra.mxu0 0.0
  %324 = vmatprep.subr.mxu0 0.0
  %325 = vmatpush1.msra.mxu0 0.0
  %326 = vmatprep.subr.mxu0 0.0
  %327 = vmatpush1.msra.mxu0 0.0
  %328 = vmatprep.subr.mxu0 0.0
  %329 = vmatpush1.msra.mxu0 0.0
  %330 = vmatprep.subr.mxu0 0.0
  %331 = vmatpush1.msra.mxu0 0.0
  %332 = vmatprep.subr.mxu0 0.0
  %333 = vmatpush1.msra.mxu0 0.0
  %334 = vmatprep.subr.mxu0 0.0
  %335 = vmatpush1.msra.mxu0 0.0
  %336 = vmatprep.subr.mxu0 0.0
  %337 = vmatpush1.msra.mxu0 0.0
  %338 = vmatprep.subr.mxu0 0.0
  %339 = vmatpush1.msra.mxu0 0.0
  %340 = vmatprep.subr.mxu0 %v213
  %341 = vmatpush1.msra.mxu0 %v212
  %342 = vmatprep.subr.mxu0 %v209
  %343 = vmatpush1.msra.mxu0 %v208
  %344 = vmatprep.subr.mxu0 %v205
  %345 = vmatpush1.msra.mxu0 %v204
  %346 = vmatprep.subr.mxu0 %v201
  %347 = vmatpush1.msra.mxu0 %v200
  %348 = vmatprep.subr.mxu0 0.0
  %349 = vmatpush2.msra.mxu0 0.0
  %350 = vmatprep.subr.mxu0 0.0
  %351 = vmatpush2.msra.mxu0 0.0
  %352 = vmatprep.subr.mxu0 0.0
  %353 = vmatpush2.msra.mxu0 0.0
  %354 = vmatprep.subr.mxu0 0.0
  %355 = vmatpush2.msra.mxu0 0.0
  %356 = vmatprep.subr.mxu0 0.0
  %357 = vmatpush2.msra.mxu0 0.0
  %358 = vmatprep.subr.mxu0 0.0
  %359 = vmatpush2.msra.mxu0 0.0
  %360 = vmatprep.subr.mxu0 0.0
  %361 = vmatpush2.msra.mxu0 0.0
  %362 = vmatprep.subr.mxu0 0.0
  %363 = vmatpush2.msra.mxu0 0.0
  %364 = vmatprep.subr.mxu0 0.0
  %365 = vmatpush2.msra.mxu0 0.0
  %366 = vmatprep.subr.mxu0 0.0
  %367 = vmatpush2.msra.mxu0 0.0
  %368 = vmatprep.subr.mxu0 0.0
  %369 = vmatpush2.msra.mxu0 0.0
  %370 = vmatprep.subr.mxu0 0.0
  %371 = vmatpush2.msra.mxu0 0.0
  %372 = vmatprep.subr.mxu0 0.0
  %373 = vmatpush2.msra.mxu0 0.0
  %374 = vmatprep.subr.mxu0 0.0
  %375 = vmatpush2.msra.mxu0 0.0
  %376 = vmatprep.subr.mxu0 0.0
  %377 = vmatpush2.msra.mxu0 0.0
  %378 = vmatprep.subr.mxu0 0.0
  %379 = vmatpush2.msra.mxu0 0.0
  %380 = vmatprep.mubr.f32.mxu0 0.0
  %381 = vmatmul.mubr.f32.gmra.mxu0 %v216
  %v382 = vpop.f32.mrf.mxu0
  %v383 = vadd.f32 0.0, %v382
  %v384 = vpop.f32.mrf.mxu0
  %v385 = vadd.f32 0.0, %v384
  %386 = vmatprep.mubr.f32.mxu0 0.0
  %387 = vmatmul.mubr.f32.gmra.mxu0 %v219
  %v388 = vpop.f32.mrf.mxu0
  %v389 = vadd.f32 0.0, %v388
  %v390 = vpop.f32.mrf.mxu0
  %v391 = vadd.f32 0.0, %v390
  %392 = vmatprep.mubr.f32.mxu0 0.0
  %393 = vmatmul.mubr.f32.gmra.mxu0 %v222
  %v394 = vpop.f32.mrf.mxu0
  %v395 = vadd.f32 0.0, %v394
  %v396 = vpop.f32.mrf.mxu0
  %v397 = vadd.f32 0.0, %v396
  %398 = vmatprep.mubr.f32.mxu0 0.0
  %399 = vmatmul.mubr.f32.gmra.mxu0 %v225
  %v400 = vpop.f32.mrf.mxu0
  %v401 = vadd.f32 0.0, %v400
  %v402 = vpop.f32.mrf.mxu0
  %v403 = vadd.f32 0.0, %v402
  %404 = vdwg.mxu0
  %v405 = vmax.f32 %v294, 0.0
  %v406 = vmax.f32 %v296, 0.0
  %v407 = vmax.f32 %v383, 0.0
  %v408 = vmax.f32 %v385, 0.0
  %v409 = vmax.f32 %v300, 0.0
  %v410 = vmax.f32 %v302, 0.0
  %v411 = vmax.f32 %v389, 0.0
  %v412 = vmax.f32 %v391, 0.0
  %v413 = vmax.f32 %v306, 0.0
  %v414 = vmax.f32 %v308, 0.0
  %v415 = vmax.f32 %v395, 0.0
  %v416 = vmax.f32 %v397, 0.0
  %v417 = vmax.f32 %v312, 0.0
  %v418 = vmax.f32 %v314, 0.0
  %v419 = vmax.f32 %v401, 0.0
  %v420 = vmax.f32 %v403, 0.0
  %v422 = vsel %vm214, %v32, 0
  %424 = vmatprep.subr.mxu0 0.0
  %425 = vmatpush1.msra.mxu0 0.0
  %426 = vmatprep.subr.mxu0 0.0
  %427 = vmatpush1.msra.mxu0 0.0
  %428 = vmatprep.subr.mxu0 0.0
  %429 = vmatpush1.msra.mxu0 0.0
  %430 = vmatprep.subr.mxu0 0.0
  %431 = vmatpush1.msra.mxu0 0.0
  %432 = vmatprep.subr.mxu0 0.0
  %433 = vmatpush1.msra.mxu0 0.0
  %434 = vmatprep.subr.mxu0 0.0
  %435 = vmatpush1.msra.mxu0 0.0
  %436 = vmatprep.subr.mxu0 0.0
  %437 = vmatpush1.msra.mxu0 0.0
  %438 = vmatprep.subr.mxu0 0.0
  %439 = vmatpush1.msra.mxu0 0.0
  %440 = vmatprep.subr.mxu0 0.0
  %441 = vmatpush1.msra.mxu0 0.0
  %442 = vmatprep.subr.mxu0 0.0
  %443 = vmatpush1.msra.mxu0 0.0
  %444 = vmatprep.subr.mxu0 0.0
  %445 = vmatpush1.msra.mxu0 0.0
  %446 = vmatprep.subr.mxu0 0.0
  %447 = vmatpush1.msra.mxu0 0.0
  %448 = vmatprep.subr.mxu0 %v418
  %449 = vmatpush1.msra.mxu0 %v417
  %450 = vmatprep.subr.mxu0 %v414
  %451 = vmatpush1.msra.mxu0 %v413
  %452 = vmatprep.subr.mxu0 %v410
  %453 = vmatpush1.msra.mxu0 %v409
  %454 = vmatprep.subr.mxu0 %v406
  %455 = vmatpush1.msra.mxu0 %v405
  %456 = vmatprep.subr.mxu0 0.0
  %457 = vmatpush2.msra.mxu0 0.0
  %458 = vmatprep.subr.mxu0 0.0
  %459 = vmatpush2.msra.mxu0 0.0
  %460 = vmatprep.subr.mxu0 0.0
  %461 = vmatpush2.msra.mxu0 0.0
  %462 = vmatprep.subr.mxu0 0.0
  %463 = vmatpush2.msra.mxu0 0.0
  %464 = vmatprep.subr.mxu0 0.0
  %465 = vmatpush2.msra.mxu0 0.0
  %466 = vmatprep.subr.mxu0 0.0
  %467 = vmatpush2.msra.mxu0 0.0
  %468 = vmatprep.subr.mxu0 0.0
  %469 = vmatpush2.msra.mxu0 0.0
  %470 = vmatprep.subr.mxu0 0.0
  %471 = vmatpush2.msra.mxu0 0.0
  %472 = vmatprep.subr.mxu0 0.0
  %473 = vmatpush2.msra.mxu0 0.0
  %474 = vmatprep.subr.mxu0 0.0
  %475 = vmatpush2.msra.mxu0 0.0
  %476 = vmatprep.subr.mxu0 0.0
  %477 = vmatpush2.msra.mxu0 0.0
  %478 = vmatprep.subr.mxu0 0.0
  %479 = vmatpush2.msra.mxu0 0.0
  %480 = vmatprep.subr.mxu0 0.0
  %481 = vmatpush2.msra.mxu0 0.0
  %482 = vmatprep.subr.mxu0 0.0
  %483 = vmatpush2.msra.mxu0 0.0
  %484 = vmatprep.subr.mxu0 0.0
  %485 = vmatpush2.msra.mxu0 0.0
  %486 = vmatprep.subr.mxu0 0.0
  %487 = vmatpush2.msra.mxu0 0.0
  %488 = vmatprep.mubr.f32.mxu0 0.0
  %489 = vmatmul.mubr.f32.gmra.mxu0 %v422
  %v490 = vpop.f32.mrf.mxu0
  %v491 = vadd.f32 0.0, %v490
  %v492 = vpop.f32.mrf.mxu0
  %v493 = vadd.f32 0.0, %v492
  %494 = vdwg.mxu0
  %495 = vmatprep.subr.mxu0 0.0
  %496 = vmatpush1.msra.mxu0 0.0
  %497 = vmatprep.subr.mxu0 0.0
  %498 = vmatpush1.msra.mxu0 0.0
  %499 = vmatprep.subr.mxu0 0.0
  %500 = vmatpush1.msra.mxu0 0.0
  %501 = vmatprep.subr.mxu0 0.0
  %502 = vmatpush1.msra.mxu0 0.0
  %503 = vmatprep.subr.mxu0 0.0
  %504 = vmatpush1.msra.mxu0 0.0
  %505 = vmatprep.subr.mxu0 0.0
  %506 = vmatpush1.msra.mxu0 0.0
  %507 = vmatprep.subr.mxu0 0.0
  %508 = vmatpush1.msra.mxu0 0.0
  %509 = vmatprep.subr.mxu0 0.0
  %510 = vmatpush1.msra.mxu0 0.0
  %511 = vmatprep.subr.mxu0 0.0
  %512 = vmatpush1.msra.mxu0 0.0
  %513 = vmatprep.subr.mxu0 0.0
  %514 = vmatpush1.msra.mxu0 0.0
  %515 = vmatprep.subr.mxu0 0.0
  %516 = vmatpush1.msra.mxu0 0.0
  %517 = vmatprep.subr.mxu0 0.0
  %518 = vmatpush1.msra.mxu0 0.0
  %519 = vmatprep.subr.mxu0 %v420
  %520 = vmatpush1.msra.mxu0 %v419
  %521 = vmatprep.subr.mxu0 %v416
  %522 = vmatpush1.msra.mxu0 %v415
  %523 = vmatprep.subr.mxu0 %v412
  %524 = vmatpush1.msra.mxu0 %v411
  %525 = vmatprep.subr.mxu0 %v408
  %526 = vmatpush1.msra.mxu0 %v407
  %527 = vmatprep.subr.mxu0 0.0
  %528 = vmatpush2.msra.mxu0 0.0
  %529 = vmatprep.subr.mxu0 0.0
  %530 = vmatpush2.msra.mxu0 0.0
  %531 = vmatprep.subr.mxu0 0.0
  %532 = vmatpush2.msra.mxu0 0.0
  %533 = vmatprep.subr.mxu0 0.0
  %534 = vmatpush2.msra.mxu0 0.0
  %535 = vmatprep.subr.mxu0 0.0
  %536 = vmatpush2.msra.mxu0 0.0
  %537 = vmatprep.subr.mxu0 0.0
  %538 = vmatpush2.msra.mxu0 0.0
  %539 = vmatprep.subr.mxu0 0.0
  %540 = vmatpush2.msra.mxu0 0.0
  %541 = vmatprep.subr.mxu0 0.0
  %542 = vmatpush2.msra.mxu0 0.0
  %543 = vmatprep.subr.mxu0 0.0
  %544 = vmatpush2.msra.mxu0 0.0
  %545 = vmatprep.subr.mxu0 0.0
  %546 = vmatpush2.msra.mxu0 0.0
  %547 = vmatprep.subr.mxu0 0.0
  %548 = vmatpush2.msra.mxu0 0.0
  %549 = vmatprep.subr.mxu0 0.0
  %550 = vmatpush2.msra.mxu0 0.0
  %551 = vmatprep.subr.mxu0 0.0
  %552 = vmatpush2.msra.mxu0 0.0
  %553 = vmatprep.subr.mxu0 0.0
  %554 = vmatpush2.msra.mxu0 0.0
  %555 = vmatprep.subr.mxu0 0.0
  %556 = vmatpush2.msra.mxu0 0.0
  %557 = vmatprep.subr.mxu0 0.0
  %558 = vmatpush2.msra.mxu0 0.0
  %559 = vmatprep.mubr.f32.mxu0 0.0
  %560 = vmatmul.mubr.f32.gmra.mxu0 %v422
  %v561 = vpop.f32.mrf.mxu0
  %v562 = vadd.f32 0.0, %v561
  %v563 = vpop.f32.mrf.mxu0
  %v564 = vadd.f32 0.0, %v563
  %565 = vdwg.mxu0
  %v570 = vrot.slane %v491, 1
  %v571 = vrot.slane %v493, 1
  %v572 = vrot.slane %v562, 1
  %v573 = vrot.slane %v564, 1
  %v578 = vmax.f32 %v491, %v570
  %v579 = vmax.f32 %v493, %v571
  %v580 = vmax.f32 %v562, %v572
  %v581 = vmax.f32 %v564, %v573
  %v582 = vlaneseq
  %v583 = vshrl.u32 %v582, 7
  %v584 = vsub.s32 0, %v583
  %v585 = vrot.slane %v578, %v584
  %v586 = vlaneseq
  %v587 = vshrl.u32 %v586, 7
  %v588 = vsub.s32 0, %v587
  %v589 = vrot.slane %v579, %v588
  %v590 = vlaneseq
  %v591 = vshrl.u32 %v590, 7
  %v592 = vsub.s32 0, %v591
  %v593 = vrot.slane %v580, %v592
  %v594 = vlaneseq
  %v595 = vshrl.u32 %v594, 7
  %v596 = vsub.s32 0, %v595
  %v597 = vrot.slane %v581, %v596
  %v598 = vsub.f32 %v491, %v585
  %v599 = vsub.f32 %v493, %v589
  %v600 = vsub.f32 %v562, %v593
  %v601 = vsub.f32 %v564, %v597
  %v602 = vmul.f32 %v598, 1.442695
  %v603 = vpow.pop %v602
  %v604 = vmul.f32 %v599, 1.442695
  %v605 = vpow.pop %v604
  %v606 = vmul.f32 %v600, 1.442695
  %v607 = vpow.pop %v606
  %v608 = vmul.f32 %v601, 1.442695
  %v609 = vpow.pop %v608
  %v614 = vrot.slane %v603, 1
  %v615 = vrot.slane %v605, 1
  %v616 = vrot.slane %v607, 1
  %v617 = vrot.slane %v609, 1
  %v622 = vadd.f32 %v603, %v614
  %v623 = vadd.f32 %v605, %v615
  %v624 = vadd.f32 %v607, %v616
  %v625 = vadd.f32 %v609, %v617
  %v626 = vlog2.pop %v622
  %v627 = vmul.f32 %v626, 0.6931472
  %v628 = vlog2.pop %v623
  %v629 = vmul.f32 %v628, 0.6931472
  %v630 = vlog2.pop %v624
  %v631 = vmul.f32 %v630, 0.6931472
  %v632 = vlog2.pop %v625
  %v633 = vmul.f32 %v632, 0.6931472
  %v634 = vadd.f32 %v578, %v627
  %v635 = vadd.f32 %v579, %v629
  %v636 = vadd.f32 %v580, %v631
  %v637 = vadd.f32 %v581, %v633
  %v638 = vlaneseq
  %v639 = vshrl.u32 %v638, 7
  %v640 = vsub.s32 0, %v639
  %v641 = vrot.slane %v634, %v640
  %v642 = vlaneseq
  %v643 = vshrl.u32 %v642, 7
  %v644 = vsub.s32 0, %v643
  %v645 = vrot.slane %v635, %v644
  %v646 = vlaneseq
  %v647 = vshrl.u32 %v646, 7
  %v648 = vsub.s32 0, %v647
  %v649 = vrot.slane %v636, %v648
  %v650 = vlaneseq
  %v651 = vshrl.u32 %v650, 7
  %v652 = vsub.s32 0, %v651
  %v653 = vrot.slane %v637, %v652
  %v654 = vsub.f32 %v491, %v641
  %v655 = vsub.f32 %v493, %v645
  %v656 = vsub.f32 %v562, %v649
  %v657 = vsub.f32 %v564, %v653
  %v662 = vcombine.low %v654, %v655
  %v663 = vcombine.low %v656, %v657
  %v665 = vunpack.c.l.s4 1983009808
  %v666 = vunpack.c.0.s8 %v665
  %v667 = vlaneseq
  %v668 = vshrl.u32 %v667, 7
  %v669 = vsub.s32 %v666, %v668
  %v670 = vrot.slane %v662, %v669
  %v672 = vunpack.c.l.s4 1983009808
  %v673 = vunpack.c.0.s8 %v672
  %v674 = vlaneseq
  %v675 = vshrl.u32 %v674, 7
  %v676 = vsub.s32 %v673, %v675
  %v677 = vrot.slane %v663, %v676
  %v678 = vcombine.low %v670, %v677
  %680 = vst [vmem:[%s5] sm:$0xff] %v678
  // Predicated region
  $region22: #{_lambda_.1} parent=0 // pred_check
    _
  $region23: #{_lambda_.1} parent=0 // pred_check_branch
    %682 = sbr.rel (0) target = $region25
  $region24: #{_lambda_.1} parent=0 // pred_region
    _
  $region25: #{_lambda_.1} parent=0 // pred_fallthru
    _
  // Predicated region
  $region26: #{_lambda_.1} parent=0 // pred_check
    _
  $region27: #{_lambda_.1} parent=0 // pred_check_branch
    %684 = sbr.rel (0) target = $region29
  $region28: #{_lambda_.1} parent=0 // pred_region
    _
  $region29: #{_lambda_.1} parent=0 // pred_fallthru
    _

</llo_original>
